<compile_context>
chip_gen: v5e
topology: v5e:2x2
jax: 0.10.0
libtpu: 0.0.40
codegen_flags: <defaults>
</compile_context>

<pallas_src>
import math
from functools import partial

import jax
import jax.numpy as jnp
from jax.experimental import pallas as pl
from jax.experimental.pallas import tpu as pltpu


# ----------------------------------------------------------------------------
# Fused kernel: Conv1d(+bias) -> ReLU -> MaxPool1d -> Flatten -> FC1(+bias)
#               -> ReLU -> FC2(+bias), whole batch in one invocation.
# ----------------------------------------------------------------------------
def cnn_fused_kernel(x_ref, wc_ref, w1_ref, w2_ref, bc_ref, b1_ref, b2_ref,
                     o_ref, *, K, stride, pool):
    B, Cin, L = x_ref.shape
    _, Cout, _ = wc_ref.shape          # wc_ref: (K, Cout, Cin), tap-major
    Lc = (L - K) // stride + 1         # conv output length (stride == 1 here)
    Lp = Lc // pool                    # pooled output length
    BL = B * L

    # ---- Stack the batch along lanes once: (Cin, B*L + K-1 zero pad) ----
    pieces = [x_ref[b] for b in range(B)]                       # (Cin, L) each
    if K > 1:
        pieces.append(jnp.zeros((Cin, K - 1), x_ref.dtype))     # pad so taps stay in-bounds
    xs = jnp.concatenate(pieces, axis=1)                        # (Cin, B*L + K - 1)

    # ---- Conv1d: K tap-shifted matmuls accumulated in f32; bias = VPU add ----
    wc = wc_ref[...]                                            # (K, Cout, Cin)
    acc = jnp.dot(wc[0], xs[:, 0:BL], preferred_element_type=jnp.float32)
    for k in range(1, K):
        acc += jnp.dot(wc[k], xs[:, k:k + BL],
                       preferred_element_type=jnp.float32)
    # Columns l >= Lc within each batch segment are junk (cross-batch / pad);
    # they are sliced away before pooling output is used.
    conv = jnp.maximum(acc + bc_ref[...], 0.0)                  # (Cout, B*L)

    # ---- MaxPool1d on the whole slab, batch split off the lane axis ----
    if L % pool == 0:
        # Pool first (2-D -> 3-D last-dim-split reshapes only), then split batch.
        pooled_flat = conv.reshape(Cout, BL // pool, pool).max(axis=-1)
        pooled = pooled_flat.reshape(Cout, B, L // pool)[:, :, :Lp]   # (Cout, B, Lp)
    else:
        conv3 = conv.reshape(Cout, B, L)
        pooled = conv3[:, :, :Lp * pool].reshape(Cout, B, Lp, pool).max(axis=-1)

    # ---- Flatten + FC1: PyTorch's channel-major flatten is folded into w1
    #      (pre-reshaped to (Cout, Lp, H)); one Cout-batched matmul over Lp,
    #      then sum the per-channel partials and add the bias. ----
    h3 = jax.lax.dot_general(
        pooled, w1_ref[...],
        dimension_numbers=(((2,), (1,)), ((0,), (0,))),
        preferred_element_type=jnp.float32)                     # (Cout, B, H)
    h = jnp.maximum(jnp.sum(h3, axis=0) + b1_ref[...], 0.0)     # (B, H)
    # TODO(synk): nn.Dropout (train-mode masking) not modeled; identity at inference
    # (and the shipped config has dropout == 0 anyway).

    # ---- FC2 ----
    out = jnp.dot(h, w2_ref[...], preferred_element_type=jnp.float32) + b2_ref[...]
    o_ref[...] = out.astype(o_ref.dtype)                        # (B, O)


# ----------------------------------------------------------------------------
# One-time parameter prep (run at parameter-load time, NOT per forward call).
# Pure layout plumbing, zero FLOPs.
# ----------------------------------------------------------------------------
def prepare_params(params):
    w_conv = params["w_conv"]                     # (Cout, Cin, K)
    Cout = w_conv.shape[0]
    F, H = params["w1"].shape
    Lp = F // Cout
    return {
        "wc": jnp.transpose(w_conv, (2, 0, 1)),   # (K, Cout, Cin): tap-major
        "bc": params["b_conv"][:, None],          # (Cout, 1)
        "w1": params["w1"].reshape(Cout, Lp, H),  # (Cout, Lp, H): c-major flatten folded in
        "b1": params["b1"][None, :],              # (1, H)
        "w2": params["w2"],                       # (H, O)
        "b2": params["b2"][None, :],              # (1, O)
    }


def cnn_forward(x, prep, *, stride, pool):
    """x: (B, Cin, L); prep: output of prepare_params (already laid out)."""
    B, Cin, L = x.shape
    K, Cout, _ = prep["wc"].shape
    H, O = prep["w2"].shape
    if stride != 1:
        # TODO(synk): stride > 1 Conv1d not implemented (strided-lane selection
        # is untested in Mosaic); the shipped config uses stride == 1.
        raise NotImplementedError("cnn_forward kernel supports stride == 1 only")

    return pl.pallas_call(
        partial(cnn_fused_kernel, K=K, stride=stride, pool=pool),
        out_shape=jax.ShapeDtypeStruct((B, O), jnp.float32),
        in_specs=[pl.BlockSpec(memory_space=pltpu.MemorySpace.VMEM)
                  for _ in range(7)],
        out_specs=pl.BlockSpec(memory_space=pltpu.MemorySpace.VMEM),
    )(x, prep["wc"], prep["w1"], prep["w2"], prep["bc"], prep["b1"], prep["b2"])


# ----------------------------------------------------------------------------
# Pure-JAX reference for correctness checking.
# ----------------------------------------------------------------------------
def reference_forward(x, params, *, stride, pool):
    out = jax.lax.conv_general_dilated(
        x, params["w_conv"], (stride,), "VALID",
        dimension_numbers=("NCH", "OIH", "NCH"))
    out = out + params["b_conv"][None, :, None]
    out = jnp.maximum(out, 0.0)
    B, Cout, Lc = out.shape
    Lp = Lc // pool
    out = out[:, :, :Lp * pool].reshape(B, Cout, Lp, pool).max(-1)
    flat = out.reshape(B, -1)
    h = jnp.maximum(flat @ params["w1"] + params["b1"], 0.0)
    return h @ params["w2"] + params["b2"]


def init_params(key, *, cin, cout, ksize, fc_in, fc_hidden, fc_out):
    """Deterministic PyTorch-style uniform init U(-1/sqrt(fan_in), 1/sqrt(fan_in))."""
    ks = jax.random.split(key, 6)
    bc = 1.0 / math.sqrt(cin * ksize)
    b1 = 1.0 / math.sqrt(fc_in)
    b2 = 1.0 / math.sqrt(fc_hidden)
    return {
        "w_conv": jax.random.uniform(ks[0], (cout, cin, ksize), jnp.float32, -bc, bc),
        "b_conv": jax.random.uniform(ks[1], (cout,), jnp.float32, -bc, bc),
        "w1": jax.random.uniform(ks[2], (fc_in, fc_hidden), jnp.float32, -b1, b1),
        "b1": jax.random.uniform(ks[3], (fc_hidden,), jnp.float32, -b1, b1),
        "w2": jax.random.uniform(ks[4], (fc_hidden, fc_out), jnp.float32, -b2, b2),
        "b2": jax.random.uniform(ks[5], (fc_out,), jnp.float32, -b2, b2),
    }


if __name__ == "__main__":
    # Config equivalent to:
    #   input_shape = (2, 4, 16)
    #   conv_layers = [{input_channels:4, output_channels:8, kernel_size:3,
    #                   stride:1, pool_size:2, activation:'relu'}]
    #   fc_layers   = [{output_size:32, activation:'relu'},
    #                  {input_size:32, output_size:10}]
    B, CIN, L = 2, 4, 16
    COUT, KSIZE, STRIDE, POOL = 8, 3, 1, 2
    LC = (L - KSIZE) // STRIDE + 1           # 14
    LP = LC // POOL                          # 7
    FC_IN = COUT * LP                        # 56
    FC_HIDDEN, FC_OUT = 32, 10

    key = jax.random.PRNGKey(0)
    k_x, k_p = jax.random.split(key)
    x = jax.random.normal(k_x, (B, CIN, L), dtype=jnp.float32)
    params = init_params(k_p, cin=CIN, cout=COUT, ksize=KSIZE,
                         fc_in=FC_IN, fc_hidden=FC_HIDDEN, fc_out=FC_OUT)

    prep = prepare_params(params)            # once, at parameter-load time
    fwd = jax.jit(partial(cnn_forward, stride=STRIDE, pool=POOL))
    out = jax.block_until_ready(fwd(x, prep))

    ref = reference_forward(x, params, stride=STRIDE, pool=POOL)
    assert out.shape == (B, FC_OUT), out.shape
    assert jnp.allclose(out, ref, atol=1e-4, rtol=1e-4), (
        f"max abs err = {jnp.max(jnp.abs(out - ref))}")

    print("KERNEL_OK")
</pallas_src>

<mosaic_0001>
module attributes {stable_mosaic.version = 11 : i64} {
  func.func @cnn_fused_kernel(%arg0: memref<2x4x16xf32, #tpu.memory_space<vmem>>, %arg1: memref<3x8x4xf32, #tpu.memory_space<vmem>>, %arg2: memref<8x7x32xf32, #tpu.memory_space<vmem>>, %arg3: memref<32x10xf32, #tpu.memory_space<vmem>>, %arg4: memref<8x1xf32, #tpu.memory_space<vmem>>, %arg5: memref<1x32xf32, #tpu.memory_space<vmem>>, %arg6: memref<1x10xf32, #tpu.memory_space<vmem>>, %arg7: memref<2x10xf32, #tpu.memory_space<vmem>>) attributes {dimension_semantics = [], scalar_prefetch = 0 : i64, scratch_operands = 0 : i64, tpu.core_type = #tpu.core_type<tc>} {
    %c0 = arith.constant 0 : index
    %c0_0 = arith.constant 0 : index
    %c0_1 = arith.constant 0 : index
    %0 = vector.load %arg0[%c0, %c0_0, %c0_1] : memref<2x4x16xf32, #tpu.memory_space<vmem>>, vector<1x4x16xf32>
    %1 = vector.shape_cast %0 : vector<1x4x16xf32> to vector<4x16xf32>
    %c1 = arith.constant 1 : index
    %c0_2 = arith.constant 0 : index
    %c0_3 = arith.constant 0 : index
    %2 = vector.load %arg0[%c1, %c0_2, %c0_3] : memref<2x4x16xf32, #tpu.memory_space<vmem>>, vector<1x4x16xf32>
    %3 = vector.shape_cast %2 : vector<1x4x16xf32> to vector<4x16xf32>
    %cst = arith.constant 0.000000e+00 : f32
    %4 = vector.broadcast %cst : f32 to vector<4x2xf32>
    %5 = tpu.concatenate %1, %3, %4 in 1 : vector<4x16xf32>, vector<4x16xf32>, vector<4x2xf32> -> vector<4x34xf32>
    %c0_4 = arith.constant 0 : index
    %c0_5 = arith.constant 0 : index
    %c0_6 = arith.constant 0 : index
    %6 = vector.load %arg1[%c0_4, %c0_5, %c0_6] : memref<3x8x4xf32, #tpu.memory_space<vmem>>, vector<3x8x4xf32>
    %7 = vector.extract_strided_slice %6 {offsets = [0, 0, 0], sizes = [1, 8, 4], strides = [1, 1, 1]} : vector<3x8x4xf32> to vector<1x8x4xf32>
    %8 = vector.shape_cast %7 : vector<1x8x4xf32> to vector<8x4xf32>
    %9 = vector.extract_strided_slice %5 {offsets = [0, 0], sizes = [4, 32], strides = [1, 1]} : vector<4x34xf32> to vector<4x32xf32>
    %cst_7 = arith.constant dense<0.000000e+00> : vector<8x32xf32>
    %10 = tpu.matmul %8, %9, %cst_7 {dimension_numbers = #tpu.dot_dimension_numbers<[1], [0], [0], [1], [0, 0, 1, 1], [], []>} : vector<8x4xf32>, vector<4x32xf32>, vector<8x32xf32> -> vector<8x32xf32>
    %11 = vector.extract_strided_slice %6 {offsets = [1, 0, 0], sizes = [1, 8, 4], strides = [1, 1, 1]} : vector<3x8x4xf32> to vector<1x8x4xf32>
    %12 = vector.shape_cast %11 : vector<1x8x4xf32> to vector<8x4xf32>
    %13 = vector.extract_strided_slice %5 {offsets = [0, 1], sizes = [4, 32], strides = [1, 1]} : vector<4x34xf32> to vector<4x32xf32>
    %cst_8 = arith.constant dense<0.000000e+00> : vector<8x32xf32>
    %14 = tpu.matmul %12, %13, %cst_8 {dimension_numbers = #tpu.dot_dimension_numbers<[1], [0], [0], [1], [0, 0, 1, 1], [], []>} : vector<8x4xf32>, vector<4x32xf32>, vector<8x32xf32> -> vector<8x32xf32>
    %15 = arith.addf %10, %14 : vector<8x32xf32>
    %16 = vector.extract_strided_slice %6 {offsets = [2, 0, 0], sizes = [1, 8, 4], strides = [1, 1, 1]} : vector<3x8x4xf32> to vector<1x8x4xf32>
    %17 = vector.shape_cast %16 : vector<1x8x4xf32> to vector<8x4xf32>
    %18 = vector.extract_strided_slice %5 {offsets = [0, 2], sizes = [4, 32], strides = [1, 1]} : vector<4x34xf32> to vector<4x32xf32>
    %cst_9 = arith.constant dense<0.000000e+00> : vector<8x32xf32>
    %19 = tpu.matmul %17, %18, %cst_9 {dimension_numbers = #tpu.dot_dimension_numbers<[1], [0], [0], [1], [0, 0, 1, 1], [], []>} : vector<8x4xf32>, vector<4x32xf32>, vector<8x32xf32> -> vector<8x32xf32>
    %20 = arith.addf %15, %19 : vector<8x32xf32>
    %c0_10 = arith.constant 0 : index
    %c0_11 = arith.constant 0 : index
    %21 = vector.load %arg4[%c0_10, %c0_11] : memref<8x1xf32, #tpu.memory_space<vmem>>, vector<8x1xf32>
    %22 = vector.broadcast %21 : vector<8x1xf32> to vector<8x32xf32>
    %23 = arith.addf %20, %22 : vector<8x32xf32>
    %cst_12 = arith.constant 0.000000e+00 : f32
    %24 = vector.broadcast %cst_12 : f32 to vector<8x32xf32>
    %25 = arith.maximumf %23, %24 : vector<8x32xf32>
    %26 = vector.shape_cast %25 : vector<8x32xf32> to vector<8x16x2xf32>
    %cst_13 = arith.constant dense<0xFF800000> : vector<8x16xf32>
    %27 = vector.multi_reduction <maximumf>, %26, %cst_13 [2] : vector<8x16x2xf32> to vector<8x16xf32>
    %28 = vector.shape_cast %27 : vector<8x16xf32> to vector<8x2x8xf32>
    %29 = vector.extract_strided_slice %28 {offsets = [0, 0, 0], sizes = [8, 2, 7], strides = [1, 1, 1]} : vector<8x2x8xf32> to vector<8x2x7xf32>
    %c0_14 = arith.constant 0 : index
    %c0_15 = arith.constant 0 : index
    %c0_16 = arith.constant 0 : index
    %30 = vector.load %arg2[%c0_14, %c0_15, %c0_16] : memref<8x7x32xf32, #tpu.memory_space<vmem>>, vector<8x7x32xf32>
    %cst_17 = arith.constant dense<0.000000e+00> : vector<8x2x32xf32>
    %31 = tpu.matmul %29, %30, %cst_17 {dimension_numbers = #tpu.dot_dimension_numbers<[2], [1], [1], [2], [0, 0, 0, 1, 1, 2], [0], [0]>} : vector<8x2x7xf32>, vector<8x7x32xf32>, vector<8x2x32xf32> -> vector<8x2x32xf32>
    %cst_18 = arith.constant dense<0.000000e+00> : vector<2x32xf32>
    %32 = vector.multi_reduction <add>, %31, %cst_18 [0] : vector<8x2x32xf32> to vector<2x32xf32>
    %c0_19 = arith.constant 0 : index
    %c0_20 = arith.constant 0 : index
    %33 = vector.load %arg5[%c0_19, %c0_20] : memref<1x32xf32, #tpu.memory_space<vmem>>, vector<1x32xf32>
    %34 = vector.broadcast %33 : vector<1x32xf32> to vector<2x32xf32>
    %35 = arith.addf %32, %34 : vector<2x32xf32>
    %cst_21 = arith.constant 0.000000e+00 : f32
    %36 = vector.broadcast %cst_21 : f32 to vector<2x32xf32>
    %37 = arith.maximumf %35, %36 : vector<2x32xf32>
    %c0_22 = arith.constant 0 : index
    %c0_23 = arith.constant 0 : index
    %38 = vector.load %arg3[%c0_22, %c0_23] : memref<32x10xf32, #tpu.memory_space<vmem>>, vector<32x10xf32>
    %cst_24 = arith.constant dense<0.000000e+00> : vector<2x10xf32>
    %39 = tpu.matmul %37, %38, %cst_24 {dimension_numbers = #tpu.dot_dimension_numbers<[1], [0], [0], [1], [0, 0, 1, 1], [], []>} : vector<2x32xf32>, vector<32x10xf32>, vector<2x10xf32> -> vector<2x10xf32>
    %c0_25 = arith.constant 0 : index
    %c0_26 = arith.constant 0 : index
    %40 = vector.load %arg6[%c0_25, %c0_26] : memref<1x10xf32, #tpu.memory_space<vmem>>, vector<1x10xf32>
    %41 = vector.broadcast %40 : vector<1x10xf32> to vector<2x10xf32>
    %42 = arith.addf %39, %41 : vector<2x10xf32>
    %c0_27 = arith.constant 0 : index
    %c0_28 = arith.constant 0 : index
    %43 = vector.load %arg7[%c0_27, %c0_28] : memref<2x10xf32, #tpu.memory_space<vmem>>, vector<2x10xf32>
    tpu.vector_store %arg7[%c0_27, %c0_28], %42 {strides = array<i32>} : memref<2x10xf32, #tpu.memory_space<vmem>>, vector<2x10xf32>,
    return
  }
}

</mosaic_0001>

<llo_original>
// kernel: cnn_forward.1
$region0: #{cnn_forward.1}
  #allocation0 [shape = 'u32[]', space=smem, size = 0x4, offset = 0x4, fixed_abs, tag = 'smem constant byte address 0x4 - core index']
  #allocation1 [shape = 'u32[72,128]{1,0:T(1,128)}', space=vmem, size = 0x9000, scoped, tag = 'internal scratch']
  %s0 = inlined_call_operand.vmem [shape: f32[2,4,16], index: 0, kind: input, shape index: {}]
  %s1 = inlined_call_operand.vmem [shape: f32[3,8,4], index: 1, kind: input, shape index: {}]
  %s2 = inlined_call_operand.vmem [shape: f32[8,7,32], index: 2, kind: input, shape index: {}]
  %s3 = inlined_call_operand.vmem [shape: f32[32,10], index: 3, kind: input, shape index: {}]
  %s4 = inlined_call_operand.vmem [shape: f32[8,1], index: 4, kind: input, shape index: {}]
  %s5 = inlined_call_operand.vmem [shape: f32[1,32], index: 5, kind: input, shape index: {}]
  %s6 = inlined_call_operand.vmem [shape: f32[1,10], index: 6, kind: input, shape index: {}]
  %s7 = inlined_call_operand.hbm [shape: f32[2,10], index: 7, kind: output, shape index: {}]
  %s8 = sld [smem:[#allocation0]]
  $region38: #{cnn_forward.1} parent=0
    _
  %s10 = ssub.s32 1, %s8
  %s11 = scalar_select 0, %s10, %s8
  $region1: #{cnn_forward.1} parent=0
    #allocation2 [shape = 'u8[1024]{0}', space=vmem, size = 0x400, scoped, tag = 'output window, operand 0, single buffered']
    #allocation3 [shape = 's32[1]{0}', space=sflag, size = 0x4, scoped, tag = 'scoped memory for cnn_forward.1']
    %12 = vsyncpa [#allocation3], 0
    // Predicated region
    $region2: #{cnn_forward.1} parent=1 // pred_check
      _
    $region3: #{cnn_forward.1} parent=1 // pred_check_branch
      %14 = sbr.rel (0) target = $region5
    $region4: #{cnn_forward.1} parent=1 // pred_region
      _
    $region5: #{cnn_forward.1} parent=1 // pred_fallthru
      _
    // Predicated region
    $region6: #{cnn_forward.1} parent=1 // pred_check
      _
    $region7: #{cnn_forward.1} parent=1 // pred_check_branch
      %16 = sbr.rel (0) target = $region9
    $region8: #{cnn_forward.1} parent=1 // pred_region
      _
    $region9: #{cnn_forward.1} parent=1 // pred_fallthru
      _
    // Predicated region
    $region10: #{cnn_forward.1} parent=1 // pred_check
      _
    $region11: #{cnn_forward.1} parent=1 // pred_check_branch
      %18 = sbr.rel (0) target = $region13
    $region12: #{cnn_forward.1} parent=1 // pred_region
      _
    $region13: #{cnn_forward.1} parent=1 // pred_fallthru
      _
    // Predicated region
    $region14: #{cnn_forward.1} parent=1 // pred_check
      _
    $region15: #{cnn_forward.1} parent=1 // pred_check_branch
      %20 = sbr.rel (0) target = $region17
    $region16: #{cnn_forward.1} parent=1 // pred_region
      _
    $region17: #{cnn_forward.1} parent=1 // pred_fallthru
      _
    // Predicated region
    $region18: #{cnn_forward.1} parent=1 // pred_check
      _
    $region19: #{cnn_forward.1} parent=1 // pred_check_branch
      %22 = sbr.rel (0) target = $region21
    $region20: #{cnn_forward.1} parent=1 // pred_region
      _
    $region21: #{cnn_forward.1} parent=1 // pred_fallthru
      _
    // Predicated region
    $region22: #{cnn_forward.1} parent=1 // pred_check
      _
    $region23: #{cnn_forward.1} parent=1 // pred_check_branch
      %24 = sbr.rel (0) target = $region25
    $region24: #{cnn_forward.1} parent=1 // pred_region
      _
    $region25: #{cnn_forward.1} parent=1 // pred_fallthru
      _
    // Predicated region
    $region26: #{cnn_forward.1} parent=1 // pred_check
      _
    $region27: #{cnn_forward.1} parent=1 // pred_check_branch
      %26 = sbr.rel (0) target = $region29
    $region28: #{cnn_forward.1} parent=1 // pred_region
      _
    $region29: #{cnn_forward.1} parent=1 // pred_fallthru
      _
    %v27 = vld [vmem:[%s0] sm:$0xf]
    %s28 = scalar_lea.vmem %s0, 4
    %v29 = vld [vmem:[%s28] sm:$0xf]
    %31 = vrot.lane.b32.xlu0 %v29, 16
    %v32 = vpop.permute.xlu0 %31
    %vm34 = vcmask 130048
    %v35 = vsel %vm34, %v27, %v32
    %vm36 = vcmask 261120
    %v37 = vsel %vm36, %v35, 0.0
    %v38 = vld [vmem:[%s1] sm:$0xff]
    %v39 = vld [vmem:[%s1 + $0x8] sm:$0xff]
    %v40 = vld [vmem:[%s1 + $0x10] sm:$0xff]
    %42 = vrot.lane.b32.xlu0 %v37, 127
    %v43 = vpop.permute.xlu0 %42
    %vm44 = vcmask 31744
    %v46 = vsel %vm44, %v39, 0
    %vm48 = vcmask 1043456
    %v49 = vsel %vm48, %v43, 0
    %51 = vmatpush.msra.mxu0 0.0
    %52 = vmatpush.msra.mxu0 0.0
    %53 = vmatpush.msra.mxu0 0.0
    %54 = vmatpush.msra.mxu0 0.0
    %55 = vmatpush.msra.mxu0 0.0
    %56 = vmatpush.msra.mxu0 0.0
    %57 = vmatpush.msra.mxu0 0.0
    %58 = vmatpush.msra.mxu0 0.0
    %59 = vmatpush.msra.mxu0 0.0
    %60 = vmatpush.msra.mxu0 0.0
    %61 = vmatpush.msra.mxu0 0.0
    %62 = vmatpush.msra.mxu0 0.0
    %63 = vmatpush.msra.mxu0 0.0
    %64 = vmatpush.msra.mxu0 0.0
    %65 = vmatpush.msra.mxu0 0.0
    %66 = vmatpush.msra.mxu0 %v49
    %67 = vmatmul.f32.gmra.mxu0 %v46
    %v68 = vpop.f32.mrf.mxu0
    %v69 = vadd.f32 0.0, %v68
    %70 = vdwg.mxu0
    %v72 = vsel %vm44, %v38, 0
    %v74 = vsel %vm48, %v37, 0
    %76 = vmatpush.msra.mxu0 0.0
    %77 = vmatpush.msra.mxu0 0.0
    %78 = vmatpush.msra.mxu0 0.0
    %79 = vmatpush.msra.mxu0 0.0
    %80 = vmatpush.msra.mxu0 0.0
    %81 = vmatpush.msra.mxu0 0.0
    %82 = vmatpush.msra.mxu0 0.0
    %83 = vmatpush.msra.mxu0 0.0
    %84 = vmatpush.msra.mxu0 0.0
    %85 = vmatpush.msra.mxu0 0.0
    %86 = vmatpush.msra.mxu0 0.0
    %87 = vmatpush.msra.mxu0 0.0
    %88 = vmatpush.msra.mxu0 0.0
    %89 = vmatpush.msra.mxu0 0.0
    %90 = vmatpush.msra.mxu0 0.0
    %91 = vmatpush.msra.mxu0 %v74
    %92 = vmatmul.f32.gmra.mxu0 %v72
    %v93 = vpop.f32.mrf.mxu0
    %v94 = vadd.f32 %v69, %v93
    %95 = vdwg.mxu0
    %96 = vrot.lane.b32.xlu0 %v37, 126
    %v97 = vpop.permute.xlu0 %96
    %v99 = vsel %vm44, %v40, 0
    %v101 = vsel %vm48, %v97, 0
    %103 = vmatpush.msra.mxu0 0.0
    %104 = vmatpush.msra.mxu0 0.0
    %105 = vmatpush.msra.mxu0 0.0
    %106 = vmatpush.msra.mxu0 0.0
    %107 = vmatpush.msra.mxu0 0.0
    %108 = vmatpush.msra.mxu0 0.0
    %109 = vmatpush.msra.mxu0 0.0
    %110 = vmatpush.msra.mxu0 0.0
    %111 = vmatpush.msra.mxu0 0.0
    %112 = vmatpush.msra.mxu0 0.0
    %113 = vmatpush.msra.mxu0 0.0
    %114 = vmatpush.msra.mxu0 0.0
    %115 = vmatpush.msra.mxu0 0.0
    %116 = vmatpush.msra.mxu0 0.0
    %117 = vmatpush.msra.mxu0 0.0
    %118 = vmatpush.msra.mxu0 %v101
    %119 = vmatmul.f32.gmra.mxu0 %v99
    %v120 = vpop.f32.mrf.mxu0
    %v121 = vadd.f32 0.0, %v120
    %122 = vdwg.mxu0
    %v123 = vadd.f32 %v94, %v121
    %v124 = vld [vmem:[%s4] sm:$0xff]
    %126 = vset.pattern.permute.xlu0 0
    %127 = vperm.xlu0 %126, %v124
    %v128 = vpop.permute.xlu0 %127
    %v130 = vadd.f32 %v123, %v128
    %v131 = vmax.f32 %v130, 0.0
    %133 = vrot.lane.b32.xlu0 %v131, 126
    %v134 = vpop.permute.xlu0 %133
    %136 = vrot.lane.b32.xlu0 %v131, 124
    %v137 = vpop.permute.xlu0 %136
    %139 = vrot.lane.b32.xlu0 %v131, 122
    %v140 = vpop.permute.xlu0 %139
    %142 = vrot.lane.b32.xlu0 %v131, 120
    %v143 = vpop.permute.xlu0 %142
    %145 = vrot.lane.b32.xlu0 %v131, 118
    %v146 = vpop.permute.xlu0 %145
    %148 = vrot.lane.b32.xlu0 %v131, 116
    %v149 = vpop.permute.xlu0 %148
    %151 = vrot.lane.b32.xlu0 %v131, 114
    %v152 = vpop.permute.xlu0 %151
    %154 = vrot.lane.b32.xlu0 %v131, 112
    %v155 = vpop.permute.xlu0 %154
    %157 = vrot.lane.b32.xlu0 %v131, 110
    %v158 = vpop.permute.xlu0 %157
    %160 = vrot.lane.b32.xlu0 %v131, 108
    %v161 = vpop.permute.xlu0 %160
    %163 = vrot.lane.b32.xlu0 %v131, 106
    %v164 = vpop.permute.xlu0 %163
    %166 = vrot.lane.b32.xlu0 %v131, 104
    %v167 = vpop.permute.xlu0 %166
    %169 = vrot.lane.b32.xlu0 %v131, 102
    %v170 = vpop.permute.xlu0 %169
    %172 = vrot.lane.b32.xlu0 %v131, 100
    %v173 = vpop.permute.xlu0 %172
    %175 = vrot.lane.b32.xlu0 %v131, 98
    %v176 = vpop.permute.xlu0 %175
    %v178 = vrot.slane %v137, 4
    %vm179 = vcmask 1047556
    %v180 = vsel %vm179, %v178, %v131
    %v181 = vrot.slane %v131, 4
    %v182 = vsel %vm179, %v137, %v181
    %v184 = vunpack.c.l.s4 1983009808
    %v185 = vunpack.c.0.s8 %v184
    %v186 = vperm.slane %v180, %v185
    %v188 = vunpack.c.l.s4 1983009808
    %v189 = vunpack.c.0.s8 %v188
    %v190 = vperm.slane %v182, %v189
    %v191 = vrot.slane %v140, 4
    %v192 = vsel %vm179, %v191, %v134
    %v193 = vrot.slane %v134, 4
    %v194 = vsel %vm179, %v140, %v193
    %v196 = vunpack.c.l.s4 1983009808
    %v197 = vunpack.c.0.s8 %v196
    %v198 = vperm.slane %v192, %v197
    %v200 = vunpack.c.l.s4 1983009808
    %v201 = vunpack.c.0.s8 %v200
    %v202 = vperm.slane %v194, %v201
    %v203 = vrot.slane %v149, 4
    %v204 = vsel %vm179, %v203, %v143
    %v205 = vrot.slane %v143, 4
    %v206 = vsel %vm179, %v149, %v205
    %v208 = vunpack.c.l.s4 1983009808
    %v209 = vunpack.c.0.s8 %v208
    %v210 = vperm.slane %v204, %v209
    %v212 = vunpack.c.l.s4 1983009808
    %v213 = vunpack.c.0.s8 %v212
    %v214 = vperm.slane %v206, %v213
    %v215 = vrot.slane %v152, 4
    %v216 = vsel %vm179, %v215, %v146
    %v217 = vrot.slane %v146, 4
    %v218 = vsel %vm179, %v152, %v217
    %v220 = vunpack.c.l.s4 1983009808
    %v221 = vunpack.c.0.s8 %v220
    %v222 = vperm.slane %v216, %v221
    %v224 = vunpack.c.l.s4 1983009808
    %v225 = vunpack.c.0.s8 %v224
    %v226 = vperm.slane %v218, %v225
    %v227 = vrot.slane %v198, 4
    %v228 = vsel %vm179, %v227, %v186
    %v229 = vrot.slane %v186, 4
    %v230 = vsel %vm179, %v198, %v229
    %v232 = vunpack.c.l.s4 1934713408
    %v233 = vunpack.c.0.s8 %v232
    %v234 = vperm.slane %v228, %v233
    %v236 = vunpack.c.l.s4 1934713408
    %v237 = vunpack.c.0.s8 %v236
    %v238 = vperm.slane %v230, %v237
    %v239 = vrot.slane %v202, 4
    %v240 = vsel %vm179, %v239, %v190
    %v241 = vrot.slane %v190, 4
    %v242 = vsel %vm179, %v202, %v241
    %v244 = vunpack.c.l.s4 1934713408
    %v245 = vunpack.c.0.s8 %v244
    %v246 = vperm.slane %v240, %v245
    %v248 = vunpack.c.l.s4 1934713408
    %v249 = vunpack.c.0.s8 %v248
    %v250 = vperm.slane %v242, %v249
    %v251 = vrot.slane %v222, 4
    %v252 = vsel %vm179, %v251, %v210
    %v253 = vrot.slane %v210, 4
    %v254 = vsel %vm179, %v222, %v253
    %v256 = vunpack.c.l.s4 1934713408
    %v257 = vunpack.c.0.s8 %v256
    %v258 = vperm.slane %v252, %v257
    %v260 = vunpack.c.l.s4 1934713408
    %v261 = vunpack.c.0.s8 %v260
    %v262 = vperm.slane %v254, %v261
    %v263 = vrot.slane %v226, 4
    %v264 = vsel %vm179, %v263, %v214
    %v265 = vrot.slane %v214, 4
    %v266 = vsel %vm179, %v226, %v265
    %v268 = vunpack.c.l.s4 1934713408
    %v269 = vunpack.c.0.s8 %v268
    %v270 = vperm.slane %v264, %v269
    %v272 = vunpack.c.l.s4 1934713408
    %v273 = vunpack.c.0.s8 %v272
    %v274 = vperm.slane %v266, %v273
    %v275 = vrot.slane %v258, 4
    %v276 = vsel %vm179, %v275, %v234
    %v277 = vrot.slane %v234, 4
    %v278 = vsel %vm179, %v258, %v277
    %v279 = vrot.slane %v262, 4
    %v280 = vsel %vm179, %v279, %v238
    %v281 = vrot.slane %v238, 4
    %v282 = vsel %vm179, %v262, %v281
    %v283 = vrot.slane %v270, 4
    %v284 = vsel %vm179, %v283, %v246
    %v285 = vrot.slane %v246, 4
    %v286 = vsel %vm179, %v270, %v285
    %v287 = vrot.slane %v274, 4
    %v288 = vsel %vm179, %v287, %v250
    %v289 = vrot.slane %v250, 4
    %v290 = vsel %vm179, %v274, %v289
    %v291 = vrot.slane %v161, 4
    %v292 = vsel %vm179, %v291, %v155
    %v293 = vrot.slane %v155, 4
    %v294 = vsel %vm179, %v161, %v293
    %v296 = vunpack.c.l.s4 1983009808
    %v297 = vunpack.c.0.s8 %v296
    %v298 = vperm.slane %v292, %v297
    %v300 = vunpack.c.l.s4 1983009808
    %v301 = vunpack.c.0.s8 %v300
    %v302 = vperm.slane %v294, %v301
    %v303 = vrot.slane %v164, 4
    %v304 = vsel %vm179, %v303, %v158
    %v305 = vrot.slane %v158, 4
    %v306 = vsel %vm179, %v164, %v305
    %v308 = vunpack.c.l.s4 1983009808
    %v309 = vunpack.c.0.s8 %v308
    %v310 = vperm.slane %v304, %v309
    %v312 = vunpack.c.l.s4 1983009808
    %v313 = vunpack.c.0.s8 %v312
    %v314 = vperm.slane %v306, %v313
    %v315 = vrot.slane %v173, 4
    %v316 = vsel %vm179, %v315, %v167
    %v317 = vrot.slane %v167, 4
    %v318 = vsel %vm179, %v173, %v317
    %v320 = vunpack.c.l.s4 1983009808
    %v321 = vunpack.c.0.s8 %v320
    %v322 = vperm.slane %v316, %v321
    %v324 = vunpack.c.l.s4 1983009808
    %v325 = vunpack.c.0.s8 %v324
    %v326 = vperm.slane %v318, %v325
    %v327 = vrot.slane %v176, 4
    %v328 = vsel %vm179, %v327, %v170
    %v329 = vrot.slane %v170, 4
    %v330 = vsel %vm179, %v176, %v329
    %v332 = vunpack.c.l.s4 1983009808
    %v333 = vunpack.c.0.s8 %v332
    %v334 = vperm.slane %v328, %v333
    %v336 = vunpack.c.l.s4 1983009808
    %v337 = vunpack.c.0.s8 %v336
    %v338 = vperm.slane %v330, %v337
    %v339 = vrot.slane %v310, 4
    %v340 = vsel %vm179, %v339, %v298
    %v341 = vrot.slane %v298, 4
    %v342 = vsel %vm179, %v310, %v341
    %v344 = vunpack.c.l.s4 1934713408
    %v345 = vunpack.c.0.s8 %v344
    %v346 = vperm.slane %v340, %v345
    %v348 = vunpack.c.l.s4 1934713408
    %v349 = vunpack.c.0.s8 %v348
    %v350 = vperm.slane %v342, %v349
    %v351 = vrot.slane %v314, 4
    %v352 = vsel %vm179, %v351, %v302
    %v353 = vrot.slane %v302, 4
    %v354 = vsel %vm179, %v314, %v353
    %v356 = vunpack.c.l.s4 1934713408
    %v357 = vunpack.c.0.s8 %v356
    %v358 = vperm.slane %v352, %v357
    %v360 = vunpack.c.l.s4 1934713408
    %v361 = vunpack.c.0.s8 %v360
    %v362 = vperm.slane %v354, %v361
    %v363 = vrot.slane %v334, 4
    %v364 = vsel %vm179, %v363, %v322
    %v365 = vrot.slane %v322, 4
    %v366 = vsel %vm179, %v334, %v365
    %v368 = vunpack.c.l.s4 1934713408
    %v369 = vunpack.c.0.s8 %v368
    %v370 = vperm.slane %v364, %v369
    %v372 = vunpack.c.l.s4 1934713408
    %v373 = vunpack.c.0.s8 %v372
    %v374 = vperm.slane %v366, %v373
    %v375 = vrot.slane %v338, 4
    %v376 = vsel %vm179, %v375, %v326
    %v377 = vrot.slane %v326, 4
    %v378 = vsel %vm179, %v338, %v377
    %v380 = vunpack.c.l.s4 1934713408
    %v381 = vunpack.c.0.s8 %v380
    %v382 = vperm.slane %v376, %v381
    %v384 = vunpack.c.l.s4 1934713408
    %v385 = vunpack.c.0.s8 %v384
    %v386 = vperm.slane %v378, %v385
    %v387 = vrot.slane %v370, 4
    %v388 = vsel %vm179, %v387, %v346
    %v389 = vrot.slane %v346, 4
    %v390 = vsel %vm179, %v370, %v389
    %v391 = vrot.slane %v374, 4
    %v392 = vsel %vm179, %v391, %v350
    %v393 = vrot.slane %v350, 4
    %v394 = vsel %vm179, %v374, %v393
    %v395 = vrot.slane %v382, 4
    %v396 = vsel %vm179, %v395, %v358
    %v397 = vrot.slane %v358, 4
    %v398 = vsel %vm179, %v382, %v397
    %v399 = vrot.slane %v386, 4
    %v400 = vsel %vm179, %v399, %v362
    %v401 = vrot.slane %v362, 4
    %v402 = vsel %vm179, %v386, %v401
    %vm403 = vcmask 15360
    %v404 = vsel %vm403, %v276, -inf
    %405 = vmax.xlane.f32.xlu0 %v404
    %v406 = vpop.xlane.xlu0 %405
    %v407 = vsel %vm403, %v388, -inf
    %408 = vmax.xlane.f32.xlu0 %v407
    %v409 = vpop.xlane.xlu0 %408
    %v410 = vsel %vm403, %v278, -inf
    %411 = vmax.xlane.f32.xlu0 %v410
    %v412 = vpop.xlane.xlu0 %411
    %v413 = vsel %vm403, %v390, -inf
    %414 = vmax.xlane.f32.xlu0 %v413
    %v415 = vpop.xlane.xlu0 %414
    %v416 = vsel %vm403, %v280, -inf
    %417 = vmax.xlane.f32.xlu0 %v416
    %v418 = vpop.xlane.xlu0 %417
    %v419 = vsel %vm403, %v392, -inf
    %420 = vmax.xlane.f32.xlu0 %v419
    %v421 = vpop.xlane.xlu0 %420
    %v422 = vsel %vm403, %v282, -inf
    %423 = vmax.xlane.f32.xlu0 %v422
    %v424 = vpop.xlane.xlu0 %423
    %v425 = vsel %vm403, %v394, -inf
    %426 = vmax.xlane.f32.xlu0 %v425
    %v427 = vpop.xlane.xlu0 %426
    %v428 = vsel %vm403, %v284, -inf
    %429 = vmax.xlane.f32.xlu0 %v428
    %v430 = vpop.xlane.xlu0 %429
    %v431 = vsel %vm403, %v396, -inf
    %432 = vmax.xlane.f32.xlu0 %v431
    %v433 = vpop.xlane.xlu0 %432
    %v434 = vsel %vm403, %v286, -inf
    %435 = vmax.xlane.f32.xlu0 %v434
    %v436 = vpop.xlane.xlu0 %435
    %v437 = vsel %vm403, %v398, -inf
    %438 = vmax.xlane.f32.xlu0 %v437
    %v439 = vpop.xlane.xlu0 %438
    %v440 = vsel %vm403, %v288, -inf
    %441 = vmax.xlane.f32.xlu0 %v440
    %v442 = vpop.xlane.xlu0 %441
    %v443 = vsel %vm403, %v400, -inf
    %444 = vmax.xlane.f32.xlu0 %v443
    %v445 = vpop.xlane.xlu0 %444
    %v446 = vsel %vm403, %v290, -inf
    %447 = vmax.xlane.f32.xlu0 %v446
    %v448 = vpop.xlane.xlu0 %447
    %v449 = vsel %vm403, %v402, -inf
    %450 = vmax.xlane.f32.xlu0 %v449
    %v451 = vpop.xlane.xlu0 %450
    %468 = vset.pattern.permute.xlu0 0
    %469 = vperm.xlu0 %468, %v406
    %v470 = vpop.permute.xlu0 %469
    %471 = vset.pattern.permute.xlu0 0
    %472 = vperm.xlu0 %471, %v412
    %v473 = vpop.permute.xlu0 %472
    %474 = vset.pattern.permute.xlu0 0
    %475 = vperm.xlu0 %474, %v418
    %v476 = vpop.permute.xlu0 %475
    %477 = vset.pattern.permute.xlu0 0
    %478 = vperm.xlu0 %477, %v424
    %v479 = vpop.permute.xlu0 %478
    %480 = vset.pattern.permute.xlu0 0
    %481 = vperm.xlu0 %480, %v430
    %v482 = vpop.permute.xlu0 %481
    %483 = vset.pattern.permute.xlu0 0
    %484 = vperm.xlu0 %483, %v436
    %v485 = vpop.permute.xlu0 %484
    %486 = vset.pattern.permute.xlu0 0
    %487 = vperm.xlu0 %486, %v442
    %v488 = vpop.permute.xlu0 %487
    %489 = vset.pattern.permute.xlu0 0
    %490 = vperm.xlu0 %489, %v448
    %v491 = vpop.permute.xlu0 %490
    %492 = vset.pattern.permute.xlu0 0
    %493 = vperm.xlu0 %492, %v409
    %v494 = vpop.permute.xlu0 %493
    %495 = vset.pattern.permute.xlu0 0
    %496 = vperm.xlu0 %495, %v415
    %v497 = vpop.permute.xlu0 %496
    %498 = vset.pattern.permute.xlu0 0
    %499 = vperm.xlu0 %498, %v421
    %v500 = vpop.permute.xlu0 %499
    %501 = vset.pattern.permute.xlu0 0
    %502 = vperm.xlu0 %501, %v427
    %v503 = vpop.permute.xlu0 %502
    %504 = vset.pattern.permute.xlu0 0
    %505 = vperm.xlu0 %504, %v433
    %v506 = vpop.permute.xlu0 %505
    %507 = vset.pattern.permute.xlu0 0
    %508 = vperm.xlu0 %507, %v439
    %v509 = vpop.permute.xlu0 %508
    %510 = vset.pattern.permute.xlu0 0
    %511 = vperm.xlu0 %510, %v445
    %v512 = vpop.permute.xlu0 %511
    %513 = vset.pattern.permute.xlu0 0
    %514 = vperm.xlu0 %513, %v451
    %v515 = vpop.permute.xlu0 %514
    %v516 = vlaneseq
    %v517 = vand.u32 %v516, 127
    %v518 = vperm.slane %v470, %v517
    %v519 = vperm.slane %v473, %v517
    %v520 = vperm.slane %v476, %v517
    %v521 = vperm.slane %v479, %v517
    %v522 = vperm.slane %v482, %v517
    %v523 = vperm.slane %v485, %v517
    %v524 = vperm.slane %v488, %v517
    %v525 = vperm.slane %v491, %v517
    %v526 = vperm.slane %v494, %v517
    %v527 = vperm.slane %v497, %v517
    %v528 = vperm.slane %v500, %v517
    %v529 = vperm.slane %v503, %v517
    %v530 = vperm.slane %v506, %v517
    %v531 = vperm.slane %v509, %v517
    %v532 = vperm.slane %v512, %v517
    %v533 = vperm.slane %v515, %v517
    %vm534 = vcmask 1041409
    %v535 = vsel %vm534, %v519, %v518
    %vm536 = vcmask 1042434
    %v537 = vsel %vm536, %v520, %v535
    %vm538 = vcmask 1043459
    %v539 = vsel %vm538, %v521, %v537
    %vm540 = vcmask 1044484
    %v541 = vsel %vm540, %v522, %v539
    %vm542 = vcmask 1045509
    %v543 = vsel %vm542, %v523, %v541
    %vm544 = vcmask 1046534
    %v545 = vsel %vm544, %v524, %v543
    %vm546 = vcmask 1047559
    %v547 = vsel %vm546, %v525, %v545
    %v548 = vsel %vm534, %v527, %v526
    %v549 = vsel %vm536, %v528, %v548
    %v550 = vsel %vm538, %v529, %v549
    %v551 = vsel %vm540, %v530, %v550
    %v552 = vsel %vm542, %v531, %v551
    %v553 = vsel %vm544, %v532, %v552
    %v554 = vsel %vm546, %v533, %v553
    %v557 = vrot.slane %v547, 4
    %v558 = vsel %vm179, 0.0, %v557
    %v560 = vunpack.c.l.s4 1983009808
    %v561 = vunpack.c.0.s8 %v560
    %v562 = vperm.slane %v547, %v561
    %v564 = vunpack.c.l.s4 1983009808
    %v565 = vunpack.c.0.s8 %v564
    %v566 = vperm.slane %v558, %v565
    %v567 = vrot.slane %v554, 4
    %v568 = vsel %vm179, 0.0, %v567
    %v570 = vunpack.c.l.s4 1983009808
    %v571 = vunpack.c.0.s8 %v570
    %v572 = vperm.slane %v554, %v571
    %v574 = vunpack.c.l.s4 1983009808
    %v575 = vunpack.c.0.s8 %v574
    %v576 = vperm.slane %v568, %v575
    %v577 = vrot.slane %v572, 4
    %v578 = vsel %vm179, %v577, %v562
    %v579 = vrot.slane %v562, 4
    %v580 = vsel %vm179, %v572, %v579
    %v582 = vunpack.c.l.s4 1934713408
    %v583 = vunpack.c.0.s8 %v582
    %v584 = vperm.slane %v578, %v583
    %v586 = vunpack.c.l.s4 1934713408
    %v587 = vunpack.c.0.s8 %v586
    %v588 = vperm.slane %v580, %v587
    %v589 = vrot.slane %v576, 4
    %v590 = vsel %vm179, %v589, %v566
    %v591 = vrot.slane %v566, 4
    %v592 = vsel %vm179, %v576, %v591
    %v594 = vunpack.c.l.s4 1934713408
    %v595 = vunpack.c.0.s8 %v594
    %v596 = vperm.slane %v590, %v595
    %v598 = vunpack.c.l.s4 1934713408
    %v599 = vunpack.c.0.s8 %v598
    %v600 = vperm.slane %v592, %v599
    %v601 = vrot.slane %v584, 4
    %v602 = vsel %vm179, 0.0, %v601
    %v603 = vrot.slane %v588, 4
    %v604 = vsel %vm179, 0.0, %v603
    %v605 = vrot.slane %v596, 4
    %v606 = vsel %vm179, 0.0, %v605
    %v607 = vrot.slane %v600, 4
    %v608 = vsel %vm179, 0.0, %v607
    %v609 = vld [vmem:[%s2] sm:$0x7f]
    %v610 = vld [vmem:[%s2 + $0x8] sm:$0x7f]
    %v611 = vld [vmem:[%s2 + $0x10] sm:$0x7f]
    %v612 = vld [vmem:[%s2 + $0x18] sm:$0x7f]
    %v613 = vld [vmem:[%s2 + $0x20] sm:$0x7f]
    %v614 = vld [vmem:[%s2 + $0x28] sm:$0x7f]
    %v615 = vld [vmem:[%s2 + $0x30] sm:$0x7f]
    %v616 = vld [vmem:[%s2 + $0x38] sm:$0x7f]
    %vm617 = vcmask 56320
    %v619 = vsel %vm617, %v584, 0
    %vm621 = vcmask 1046528
    %v623 = vsel %vm621, %v609, 0
    %625 = vmatpush.msra.mxu0 0.0
    %626 = vmatpush.msra.mxu0 0.0
    %627 = vmatpush.msra.mxu0 0.0
    %628 = vmatpush.msra.mxu0 0.0
    %629 = vmatpush.msra.mxu0 0.0
    %630 = vmatpush.msra.mxu0 0.0
    %631 = vmatpush.msra.mxu0 0.0
    %632 = vmatpush.msra.mxu0 0.0
    %633 = vmatpush.msra.mxu0 0.0
    %634 = vmatpush.msra.mxu0 0.0
    %635 = vmatpush.msra.mxu0 0.0
    %636 = vmatpush.msra.mxu0 0.0
    %637 = vmatpush.msra.mxu0 0.0
    %638 = vmatpush.msra.mxu0 0.0
    %639 = vmatpush.msra.mxu0 0.0
    %640 = vmatpush.msra.mxu0 %v623
    %641 = vmatmul.f32.gmra.mxu0 %v619
    %v642 = vpop.f32.mrf.mxu0
    %v643 = vadd.f32 0.0, %v642
    %644 = vdwg.mxu0
    %v646 = vsel %vm617, %v602, 0
    %v649 = vsel %vm621, %v610, 0
    %651 = vmatpush.msra.mxu0 0.0
    %652 = vmatpush.msra.mxu0 0.0
    %653 = vmatpush.msra.mxu0 0.0
    %654 = vmatpush.msra.mxu0 0.0
    %655 = vmatpush.msra.mxu0 0.0
    %656 = vmatpush.msra.mxu0 0.0
    %657 = vmatpush.msra.mxu0 0.0
    %658 = vmatpush.msra.mxu0 0.0
    %659 = vmatpush.msra.mxu0 0.0
    %660 = vmatpush.msra.mxu0 0.0
    %661 = vmatpush.msra.mxu0 0.0
    %662 = vmatpush.msra.mxu0 0.0
    %663 = vmatpush.msra.mxu0 0.0
    %664 = vmatpush.msra.mxu0 0.0
    %665 = vmatpush.msra.mxu0 0.0
    %666 = vmatpush.msra.mxu0 %v649
    %667 = vmatmul.f32.gmra.mxu0 %v646
    %v668 = vpop.f32.mrf.mxu0
    %v669 = vadd.f32 0.0, %v668
    %670 = vdwg.mxu0
    %v672 = vsel %vm617, %v588, 0
    %v675 = vsel %vm621, %v611, 0
    %677 = vmatpush.msra.mxu0 0.0
    %678 = vmatpush.msra.mxu0 0.0
    %679 = vmatpush.msra.mxu0 0.0
    %680 = vmatpush.msra.mxu0 0.0
    %681 = vmatpush.msra.mxu0 0.0
    %682 = vmatpush.msra.mxu0 0.0
    %683 = vmatpush.msra.mxu0 0.0
    %684 = vmatpush.msra.mxu0 0.0
    %685 = vmatpush.msra.mxu0 0.0
    %686 = vmatpush.msra.mxu0 0.0
    %687 = vmatpush.msra.mxu0 0.0
    %688 = vmatpush.msra.mxu0 0.0
    %689 = vmatpush.msra.mxu0 0.0
    %690 = vmatpush.msra.mxu0 0.0
    %691 = vmatpush.msra.mxu0 0.0
    %692 = vmatpush.msra.mxu0 %v675
    %693 = vmatmul.f32.gmra.mxu0 %v672
    %v694 = vpop.f32.mrf.mxu0
    %v695 = vadd.f32 0.0, %v694
    %696 = vdwg.mxu0
    %v698 = vsel %vm617, %v604, 0
    %v701 = vsel %vm621, %v612, 0
    %703 = vmatpush.msra.mxu0 0.0
    %704 = vmatpush.msra.mxu0 0.0
    %705 = vmatpush.msra.mxu0 0.0
    %706 = vmatpush.msra.mxu0 0.0
    %707 = vmatpush.msra.mxu0 0.0
    %708 = vmatpush.msra.mxu0 0.0
    %709 = vmatpush.msra.mxu0 0.0
    %710 = vmatpush.msra.mxu0 0.0
    %711 = vmatpush.msra.mxu0 0.0
    %712 = vmatpush.msra.mxu0 0.0
    %713 = vmatpush.msra.mxu0 0.0
    %714 = vmatpush.msra.mxu0 0.0
    %715 = vmatpush.msra.mxu0 0.0
    %716 = vmatpush.msra.mxu0 0.0
    %717 = vmatpush.msra.mxu0 0.0
    %718 = vmatpush.msra.mxu0 %v701
    %719 = vmatmul.f32.gmra.mxu0 %v698
    %v720 = vpop.f32.mrf.mxu0
    %v721 = vadd.f32 0.0, %v720
    %722 = vdwg.mxu0
    %v724 = vsel %vm617, %v596, 0
    %v727 = vsel %vm621, %v613, 0
    %729 = vmatpush.msra.mxu0 0.0
    %730 = vmatpush.msra.mxu0 0.0
    %731 = vmatpush.msra.mxu0 0.0
    %732 = vmatpush.msra.mxu0 0.0
    %733 = vmatpush.msra.mxu0 0.0
    %734 = vmatpush.msra.mxu0 0.0
    %735 = vmatpush.msra.mxu0 0.0
    %736 = vmatpush.msra.mxu0 0.0
    %737 = vmatpush.msra.mxu0 0.0
    %738 = vmatpush.msra.mxu0 0.0
    %739 = vmatpush.msra.mxu0 0.0
    %740 = vmatpush.msra.mxu0 0.0
    %741 = vmatpush.msra.mxu0 0.0
    %742 = vmatpush.msra.mxu0 0.0
    %743 = vmatpush.msra.mxu0 0.0
    %744 = vmatpush.msra.mxu0 %v727
    %745 = vmatmul.f32.gmra.mxu0 %v724
    %v746 = vpop.f32.mrf.mxu0
    %v747 = vadd.f32 0.0, %v746
    %748 = vdwg.mxu0
    %v750 = vsel %vm617, %v606, 0
    %v753 = vsel %vm621, %v614, 0
    %755 = vmatpush.msra.mxu0 0.0
    %756 = vmatpush.msra.mxu0 0.0
    %757 = vmatpush.msra.mxu0 0.0
    %758 = vmatpush.msra.mxu0 0.0
    %759 = vmatpush.msra.mxu0 0.0
    %760 = vmatpush.msra.mxu0 0.0
    %761 = vmatpush.msra.mxu0 0.0
    %762 = vmatpush.msra.mxu0 0.0
    %763 = vmatpush.msra.mxu0 0.0
    %764 = vmatpush.msra.mxu0 0.0
    %765 = vmatpush.msra.mxu0 0.0
    %766 = vmatpush.msra.mxu0 0.0
    %767 = vmatpush.msra.mxu0 0.0
    %768 = vmatpush.msra.mxu0 0.0
    %769 = vmatpush.msra.mxu0 0.0
    %770 = vmatpush.msra.mxu0 %v753
    %771 = vmatmul.f32.gmra.mxu0 %v750
    %v772 = vpop.f32.mrf.mxu0
    %v773 = vadd.f32 0.0, %v772
    %774 = vdwg.mxu0
    %v776 = vsel %vm617, %v600, 0
    %v779 = vsel %vm621, %v615, 0
    %781 = vmatpush.msra.mxu0 0.0
    %782 = vmatpush.msra.mxu0 0.0
    %783 = vmatpush.msra.mxu0 0.0
    %784 = vmatpush.msra.mxu0 0.0
    %785 = vmatpush.msra.mxu0 0.0
    %786 = vmatpush.msra.mxu0 0.0
    %787 = vmatpush.msra.mxu0 0.0
    %788 = vmatpush.msra.mxu0 0.0
    %789 = vmatpush.msra.mxu0 0.0
    %790 = vmatpush.msra.mxu0 0.0
    %791 = vmatpush.msra.mxu0 0.0
    %792 = vmatpush.msra.mxu0 0.0
    %793 = vmatpush.msra.mxu0 0.0
    %794 = vmatpush.msra.mxu0 0.0
    %795 = vmatpush.msra.mxu0 0.0
    %796 = vmatpush.msra.mxu0 %v779
    %797 = vmatmul.f32.gmra.mxu0 %v776
    %v798 = vpop.f32.mrf.mxu0
    %v799 = vadd.f32 0.0, %v798
    %800 = vdwg.mxu0
    %v802 = vsel %vm617, %v608, 0
    %v805 = vsel %vm621, %v616, 0
    %807 = vmatpush.msra.mxu0 0.0
    %808 = vmatpush.msra.mxu0 0.0
    %809 = vmatpush.msra.mxu0 0.0
    %810 = vmatpush.msra.mxu0 0.0
    %811 = vmatpush.msra.mxu0 0.0
    %812 = vmatpush.msra.mxu0 0.0
    %813 = vmatpush.msra.mxu0 0.0
    %814 = vmatpush.msra.mxu0 0.0
    %815 = vmatpush.msra.mxu0 0.0
    %816 = vmatpush.msra.mxu0 0.0
    %817 = vmatpush.msra.mxu0 0.0
    %818 = vmatpush.msra.mxu0 0.0
    %819 = vmatpush.msra.mxu0 0.0
    %820 = vmatpush.msra.mxu0 0.0
    %821 = vmatpush.msra.mxu0 0.0
    %822 = vmatpush.msra.mxu0 %v805
    %823 = vmatmul.f32.gmra.mxu0 %v802
    %v824 = vpop.f32.mrf.mxu0
    %v825 = vadd.f32 0.0, %v824
    %826 = vdwg.mxu0
    %vm827 = vcmask 254976
    %v828 = vsel %vm827, %v643, 0.0
    %v829 = vsel %vm827, %v669, 0.0
    %v830 = vadd.f32 %v828, %v829
    %v831 = vsel %vm827, %v695, 0.0
    %v832 = vadd.f32 %v830, %v831
    %v833 = vsel %vm827, %v721, 0.0
    %v834 = vadd.f32 %v832, %v833
    %v835 = vsel %vm827, %v747, 0.0
    %v836 = vadd.f32 %v834, %v835
    %v837 = vsel %vm827, %v773, 0.0
    %v838 = vadd.f32 %v836, %v837
    %v839 = vsel %vm827, %v799, 0.0
    %v840 = vadd.f32 %v838, %v839
    %v841 = vsel %vm827, %v825, 0.0
    %v842 = vadd.f32 %v840, %v841
    %v843 = vld [vmem:[%s5] sm:$0x1]
    %v845 = vperm.slane %v843, 0
    %v847 = vadd.f32 %v842, %v845
    %v848 = vmax.f32 %v847, 0.0
    %v849 = vld [vmem:[%s3] sm:$0xff]
    %v850 = vld [vmem:[%s3 + $0x8] sm:$0xff]
    %v851 = vld [vmem:[%s3 + $0x10] sm:$0xff]
    %v852 = vld [vmem:[%s3 + $0x18] sm:$0xff]
    %v853 = vld [vmem:[%s6] sm:$0x1]
    %v855 = vperm.slane %v853, 0
    %v858 = vsel %vm36, %v848, 0
    %860 = vmatpush.msra.mxu0 0.0
    %861 = vmatpush.msra.mxu0 0.0
    %862 = vmatpush.msra.mxu0 0.0
    %863 = vmatpush.msra.mxu0 0.0
    %864 = vmatpush.msra.mxu0 0.0
    %865 = vmatpush.msra.mxu0 0.0
    %866 = vmatpush.msra.mxu0 0.0
    %867 = vmatpush.msra.mxu0 0.0
    %868 = vmatpush.msra.mxu0 0.0
    %869 = vmatpush.msra.mxu0 0.0
    %870 = vmatpush.msra.mxu0 0.0
    %871 = vmatpush.msra.mxu0 0.0
    %872 = vmatpush.msra.mxu0 %v852
    %873 = vmatpush.msra.mxu0 %v851
    %874 = vmatpush.msra.mxu0 %v850
    %875 = vmatpush.msra.mxu0 %v849
    %876 = vmatmul.f32.gmra.mxu0 %v858
    %v877 = vpop.f32.mrf.mxu0
    %v878 = vadd.f32 %v855, %v877
    %879 = vdwg.mxu0
    %vm880 = vcmask 74752
    %881 = vst.msk [vmem:[#allocation2] sm:$0x3] %vm880, %v878
    // Predicated region
    $region30: #{cnn_forward.1} parent=1 // pred_check
      _
    $region31: #{cnn_forward.1} parent=1 // pred_check_branch
      %883 = sbr.rel (0) target = $region33
    $region32: #{cnn_forward.1} parent=1 // pred_region
      %885 = vsyncadd [#allocation3], 0
      %s887 = sshll.u32 [#allocation2], 4
      %s888 = int_to_ptr.vmem [resolvable:$true] %s887
      %s889 = sshll.u32 %s7, 4
      %s890 = int_to_ptr.hbm [resolvable:$true] %s889
      %892 = dma.vmem_to_hbm [thread:$0]  %s888, 32, %s890, [#allocation3]
    $region33: #{cnn_forward.1} parent=1 // pred_fallthru
      _
    // Predicated region
    $region34: #{cnn_forward.1} parent=1 // pred_check
      _
    $region35: #{cnn_forward.1} parent=1 // pred_check_branch
      %894 = sbr.rel (0) target = $region37
    $region36: #{cnn_forward.1} parent=1 // pred_region
      %896 = dma.done [#allocation3], 32
    $region37: #{cnn_forward.1} parent=1 // pred_fallthru
      _
    %897 = vsyncpa [#allocation3], 1

</llo_original>
